<compile_context>
chip_gen: v7x
topology: tpu7x:2x2x1
jax: 0.10.0
libtpu: 0.0.40
codegen_flags: <defaults>
</compile_context>

<pallas_src>
import numpy as np
import jax
import jax.numpy as jnp
from jax.experimental import pallas as pl
from jax.experimental.pallas import tpu as pltpu


_VMEM_WORKING_SET = 28 * 1024 * 1024   # per-core tile budget target (v7x-safe)
_VMEM_LIMIT_BYTES = 48 * 1024 * 1024   # < 64 MiB so it also fits v7x's VMEM


def _round_up(a, b):
    return ((a + b - 1) // b) * b


def _avg_pool_kernel(rcnt_ref, group_ref, x_ref, out_ref, acc_ref):
    # rcnt_ref : (g_pad, 1) f32  -- host-precomputed 1/count per group
    # group_ref: (1, n_tile) int32 -- dense group index per sample (lane axis)
    # x_ref    : (n_tile, c_tile)  -- features (native dtype)
    # out_ref  : (g_pad, c_tile) f32
    # acc_ref  : (g_pad, c_tile) f32 scratch (per-group sums)
    k_i = pl.program_id(1)

    @pl.when(k_i == 0)
    def _():
        acc_ref[...] = jnp.zeros_like(acc_ref)

    g_pad = acc_ref.shape[0]
    n_tile = x_ref.shape[0]

    xt = x_ref[...]
    # One-hot built from iota == group labels, directly in the MXU LHS dtype
    # (avoids an extra f32->bf16 pack/relayout pass when x is bf16).
    lhs_dtype = jnp.bfloat16 if xt.dtype == jnp.bfloat16 else jnp.float32
    gidx = jax.lax.broadcasted_iota(jnp.int32, (g_pad, n_tile), 0)
    onehot = (gidx == group_ref[...]).astype(lhs_dtype)            # (g_pad, n_tile)
    rhs = xt if xt.dtype == lhs_dtype else xt.astype(jnp.float32)
    acc_ref[...] += jnp.dot(onehot, rhs, preferred_element_type=jnp.float32)

    @pl.when(k_i == pl.num_programs(1) - 1)
    def _():
        # Reciprocal-multiply with host-precomputed counts (<=1 ulp vs an exact
        # divide; counts are exact in f32 up to 2^24 members per group).
        out_ref[...] = (acc_ref[...] * rcnt_ref[...]).astype(out_ref.dtype)


def _max_pool_kernel(lo_ref, hi_ref, group_ref, x_ref, out_ref, acc_ref):
    # lo_ref/hi_ref: (num_k,) int32 SMEM (scalar prefetch) -- group-id range per N tile
    # group_ref    : (n_tile, 1) int32 -- dense group index per sample (sublane axis)
    # x_ref        : (n_tile, c_tile)  -- features (native dtype)
    # out_ref      : (g_pad, c_tile) f32
    # acc_ref      : (g_pad, c_tile) f32 scratch (running per-group max)
    k_i = pl.program_id(1)
    neg32 = jnp.float32(jnp.finfo(jnp.float32).min)

    @pl.when(k_i == 0)
    def _():
        acc_ref[...] = jnp.full_like(acc_ref, neg32)

    xt = x_ref[...]                                   # compare/select in input dtype
    neg_x = jnp.asarray(jnp.finfo(xt.dtype).min, xt.dtype)
    gcol = group_ref[...]                             # (n_tile, 1)

    lo = lo_ref[k_i]
    hi = hi_ref[k_i]

    # Only visit groups actually present in this N tile (rows are host-sorted by
    # group when G is large, so [lo, hi] is tight). Bounded (n_tile, c_tile)
    # working set; never materializes a (G, N, C) intermediate.
    def body(gi, carry):
        sel = gcol == gi                                                   # (n_tile, 1)
        m = jnp.max(jnp.where(sel, xt, neg_x), axis=0, keepdims=True)      # (1, c_tile)
        row = acc_ref[pl.ds(gi, 1), :]
        acc_ref[pl.ds(gi, 1), :] = jnp.maximum(row, m.astype(jnp.float32))
        return carry

    jax.lax.fori_loop(lo, hi + 1, body, 0)

    @pl.when(k_i == pl.num_programs(1) - 1)
    def _():
        out_ref[...] = acc_ref[...].astype(out_ref.dtype)


def _choose_tile(dim, max_tile, unit=128):
    """Pick (tile, padded_dim) for one axis.

    Full extent when it fits (no padding, contiguous per-row DMA); otherwise a
    `unit`-aligned tile, preferring choices that avoid padding, then larger tiles.
    """
    if dim <= max_tile:
        return dim, dim
    max_aligned = max(unit, (max_tile // unit) * unit)
    floor = min(512, max_aligned)
    best_t, best_pad = None, None
    t = max_aligned
    while t >= floor:
        padded = _round_up(dim, t)
        if best_pad is None or padded < best_pad:
            best_t, best_pad = t, padded
        t -= unit
    return best_t, best_pad


def _pad_2d(x, n_pad, c_pad):
    n, c = x.shape
    if n == n_pad and c == c_pad:
        return x                        # aligned common case: no extra HBM pass
    return jnp.pad(x, ((0, n_pad - n), (0, c_pad - c)))


def group_pool(x, group, pool_type="avg_pool", *,
               max_n_tile=1024, max_c_tile=2048, sort_threshold=32):
    """Pallas equivalent of GroupPool.forward(x, group)."""
    if pool_type not in ("avg_pool", "max_pool"):
        raise ValueError("Unrecognized pooling option: %s" % pool_type)

    x = jnp.asarray(x)
    if not jnp.issubdtype(x.dtype, jnp.floating):
        x = x.astype(jnp.float32)
    n, c = x.shape

    # torch.unique equivalent (sorted unique labels + dense inverse map), host-side.
    group_np = np.asarray(group)
    uniq, inv = np.unique(group_np, return_inverse=True)
    inv = inv.astype(np.int32)
    g = int(uniq.shape[0])

    # Sublane-align the group axis of the accumulator / one-hot LHS.
    g_unit = 16 if x.dtype == jnp.bfloat16 else 8
    g_pad = _round_up(max(g, 1), g_unit)

    # ---- tile selection ----
    n_tile, n_pad = _choose_tile(n, max_n_tile)
    x_isz = x.dtype.itemsize
    # VMEM working set per lane column: 2 double-buffered x tiles + f32 acc +
    # 2 buffered f32 out tiles; cap c_tile so a large G still fits on v7x.
    per_col = 2 * n_tile * x_isz + 3 * g_pad * 4
    c_cap = max(128, min(max_c_tile, (_VMEM_WORKING_SET // per_col) // 128 * 128))
    c_tile, c_pad = _choose_tile(c, c_cap)
    # v7x megacore: give the parallel C axis >=2 tiles when C is wide enough that
    # the split keeps each per-row DMA chunk large.
    if c_tile == c and c >= 1024 and c % 256 == 0 and (c // 2) <= c_cap:
        c_tile = c // 2
    num_k = n_pad // n_tile
    num_c = c_pad // c_tile

    sentinel = np.int32(g_pad)          # label for padded rows; never matches a group
    compiler_params = pltpu.CompilerParams(
        dimension_semantics=("parallel", "arbitrary"),
        vmem_limit_bytes=_VMEM_LIMIT_BYTES,
    )

    if pool_type == "avg_pool":
        # Host-side counts (bincount of the dense inverse map).
        counts = np.bincount(inv, minlength=g).astype(np.float32)
        rcnt = np.zeros((g_pad, 1), np.float32)
        rcnt[:g, 0] = 1.0 / counts
        gid = np.full((1, n_pad), sentinel, np.int32)
        gid[0, :n] = inv
        x_in = _pad_2d(x, n_pad, c_pad)

        out = pl.pallas_call(
            _avg_pool_kernel,
            out_shape=jax.ShapeDtypeStruct((g_pad, c_pad), jnp.float32),
            grid_spec=pltpu.PrefetchScalarGridSpec(
                num_scalar_prefetch=0,
                grid=(num_c, num_k),
                in_specs=[
                    pl.BlockSpec((g_pad, 1), lambda ci, ki: (0, 0)),
                    pl.BlockSpec((1, n_tile), lambda ci, ki: (0, ki)),
                    pl.BlockSpec((n_tile, c_tile), lambda ci, ki: (ki, ci)),
                ],
                out_specs=pl.BlockSpec((g_pad, c_tile), lambda ci, ki: (0, ci)),
                scratch_shapes=[pltpu.VMEM((g_pad, c_tile), jnp.float32)],
            ),
            compiler_params=compiler_params,
        )(jnp.asarray(rcnt), jnp.asarray(gid), x_in)
        return out[:g, :c]

    # ---- max_pool ----
    if g > sort_threshold:
        # Sort rows by group (the inverse map already exists, so the order is free
        # on the host); per-tile group ranges become tight -> ~O((G*n_tile + N)*C).
        order = np.argsort(inv, kind="stable")
        inv_k = inv[order]
        take_idx = np.zeros((n_pad,), np.int32)
        take_idx[:n] = order.astype(np.int32)      # padded rows reuse row 0 (masked)
        x_rows = jnp.take(x, jnp.asarray(take_idx), axis=0)
        x_in = _pad_2d(x_rows, n_pad, c_pad)
    else:
        # Few groups: skip the gather (saves an extra HBM pass over x); the loop
        # simply covers all groups in every tile.
        inv_k = inv
        x_in = _pad_2d(x, n_pad, c_pad)

    gid = np.full((n_pad, 1), sentinel, np.int32)
    gid[:n, 0] = inv_k

    tile_lo = np.zeros((num_k,), np.int32)
    tile_hi = np.full((num_k,), g - 1, np.int32)
    if g > sort_threshold:
        for ki in range(num_k):
            a = ki * n_tile
            b = min(a + n_tile, n)
            tile_lo[ki] = inv_k[a]
            tile_hi[ki] = inv_k[b - 1]

    out = pl.pallas_call(
        _max_pool_kernel,
        out_shape=jax.ShapeDtypeStruct((g_pad, c_pad), jnp.float32),
        grid_spec=pltpu.PrefetchScalarGridSpec(
            num_scalar_prefetch=2,
            grid=(num_c, num_k),
            in_specs=[
                pl.BlockSpec((n_tile, 1), lambda ci, ki, lo, hi: (ki, 0)),
                pl.BlockSpec((n_tile, c_tile), lambda ci, ki, lo, hi: (ki, ci)),
            ],
            out_specs=pl.BlockSpec((g_pad, c_tile), lambda ci, ki, lo, hi: (0, ci)),
            scratch_shapes=[pltpu.VMEM((g_pad, c_tile), jnp.float32)],
        ),
        compiler_params=compiler_params,
    )(jnp.asarray(tile_lo), jnp.asarray(tile_hi), jnp.asarray(gid), x_in)
    return out[:g, :c]


def _reference(x, group, pool_type):
    x = np.asarray(x, np.float32)
    group = np.asarray(group)
    uniq = np.unique(group)
    out = np.zeros((uniq.shape[0], x.shape[1]), np.float32)
    for i, gval in enumerate(uniq):
        sel = x[group == gval]
        out[i] = sel.mean(axis=0) if pool_type == "avg_pool" else sel.max(axis=0)
    return out


def _check(x, group, **kw):
    for pool_type in ("avg_pool", "max_pool"):
        out = jax.block_until_ready(group_pool(x, group, pool_type=pool_type, **kw))
        np.testing.assert_allclose(np.asarray(out), _reference(x, group, pool_type),
                                   rtol=1e-5, atol=1e-5)


if __name__ == "__main__":
    key = jax.random.PRNGKey(0)
    k1, k2, k3, k4 = jax.random.split(key, 4)

    # Small case matching the module (N samples x C features, G taxa groups).
    x = jax.random.normal(k1, (16, 32), dtype=jnp.float32)
    group = jax.random.randint(k2, (16,), 0, 4, dtype=jnp.int32)
    _check(x, group)

    # Larger group count -> exercises the sorted-segment max_pool path.
    x2 = jax.random.normal(k3, (200, 160), dtype=jnp.float32)
    group2 = jax.random.randint(k4, (200,), 0, 48, dtype=jnp.int32)
    _check(x2, group2)

    # Force multi-tile grids (reduction + parallel axes) and row/column padding.
    _check(x2, group2, max_n_tile=128, max_c_tile=128)

    print("KERNEL_OK")
</pallas_src>

<mosaic_0001>
module attributes {stable_mosaic.version = 11 : i64} {
  func.func @_avg_pool_kernel(%arg0: i32, %arg1: i32, %arg2: memref<8x1xf32, #tpu.memory_space<vmem>>, %arg3: memref<1x16xi32, #tpu.memory_space<vmem>>, %arg4: memref<16x32xf32, #tpu.memory_space<vmem>>, %arg5: memref<8x32xf32, #tpu.memory_space<vmem>>, %arg6: memref<8x32xf32, #tpu.memory_space<vmem>>) attributes {dimension_semantics = [#tpu.dimension_semantics<parallel>, #tpu.dimension_semantics<arbitrary>], iteration_bounds = array<i64: 1, 1>, scalar_prefetch = 0 : i64, scratch_operands = 1 : i64, tpu.core_type = #tpu.core_type<tc>, window_params = [{pipeline_mode = #tpu.pipeline_mode<synchronous>, transform_indices = @transform_0, window_bounds = array<i64: 8, 1>}, {transform_indices = @transform_1, window_bounds = array<i64: 1, 16>}, {transform_indices = @transform_2, window_bounds = array<i64: 16, 32>}, {transform_indices = @transform_3, window_bounds = array<i64: 8, 32>}]} {
    %c0_i32 = arith.constant 0 : i32
    %0 = arith.cmpi eq, %arg1, %c0_i32 : i32
    %1 = arith.extui %0 : i1 to i32
    %c0_i32_0 = arith.constant 0 : i32
    %2 = arith.cmpi ne, %1, %c0_i32_0 : i32
    scf.if %2 {
      %cst_10 = arith.constant 0.000000e+00 : f32
      %17 = vector.broadcast %cst_10 : f32 to vector<8x32xf32>
      %c0_11 = arith.constant 0 : index
      %c0_12 = arith.constant 0 : index
      %18 = vector.load %arg6[%c0_11, %c0_12] : memref<8x32xf32, #tpu.memory_space<vmem>>, vector<8x32xf32>
      tpu.vector_store %arg6[%c0_11, %c0_12], %17 {strides = array<i32>} : memref<8x32xf32, #tpu.memory_space<vmem>>, vector<8x32xf32>,
    } else {
    }
    %c0 = arith.constant 0 : index
    %c0_1 = arith.constant 0 : index
    %3 = vector.load %arg4[%c0, %c0_1] : memref<16x32xf32, #tpu.memory_space<vmem>>, vector<16x32xf32>
    %4 = tpu.iota {dimensions = array<i32: 0>} : vector<8x16xi32>
    %c0_2 = arith.constant 0 : index
    %c0_3 = arith.constant 0 : index
    %5 = vector.load %arg3[%c0_2, %c0_3] : memref<1x16xi32, #tpu.memory_space<vmem>>, vector<1x16xi32>
    %6 = vector.broadcast %5 : vector<1x16xi32> to vector<8x16xi32>
    %7 = arith.cmpi eq, %4, %6 : vector<8x16xi32>
    %8 = arith.extui %7 : vector<8x16xi1> to vector<8x16xi32>
    %9 = arith.sitofp %8 : vector<8x16xi32> to vector<8x16xf32>
    %c0_4 = arith.constant 0 : index
    %c0_5 = arith.constant 0 : index
    %10 = vector.load %arg6[%c0_4, %c0_5] : memref<8x32xf32, #tpu.memory_space<vmem>>, vector<8x32xf32>
    %cst = arith.constant dense<0.000000e+00> : vector<8x32xf32>
    %11 = tpu.matmul %9, %3, %cst {dimension_numbers = #tpu.dot_dimension_numbers<[1], [0], [0], [1], [0, 0, 1, 1], [], []>} : vector<8x16xf32>, vector<16x32xf32>, vector<8x32xf32> -> vector<8x32xf32>
    %12 = arith.addf %10, %11 : vector<8x32xf32>
    %c0_6 = arith.constant 0 : index
    %c0_7 = arith.constant 0 : index
    %13 = vector.load %arg6[%c0_6, %c0_7] : memref<8x32xf32, #tpu.memory_space<vmem>>, vector<8x32xf32>
    tpu.vector_store %arg6[%c0_6, %c0_7], %12 {strides = array<i32>} : memref<8x32xf32, #tpu.memory_space<vmem>>, vector<8x32xf32>,
    %c0_i32_8 = arith.constant 0 : i32
    %14 = arith.cmpi eq, %arg1, %c0_i32_8 : i32
    %15 = arith.extui %14 : i1 to i32
    %c0_i32_9 = arith.constant 0 : i32
    %16 = arith.cmpi ne, %15, %c0_i32_9 : i32
    scf.if %16 {
      %c0_10 = arith.constant 0 : index
      %c0_11 = arith.constant 0 : index
      %17 = vector.load %arg6[%c0_10, %c0_11] : memref<8x32xf32, #tpu.memory_space<vmem>>, vector<8x32xf32>
      %c0_12 = arith.constant 0 : index
      %c0_13 = arith.constant 0 : index
      %18 = vector.load %arg2[%c0_12, %c0_13] : memref<8x1xf32, #tpu.memory_space<vmem>>, vector<8x1xf32>
      %19 = vector.broadcast %18 : vector<8x1xf32> to vector<8x32xf32>
      %20 = arith.mulf %17, %19 : vector<8x32xf32>
      %c0_14 = arith.constant 0 : index
      %c0_15 = arith.constant 0 : index
      %21 = vector.load %arg5[%c0_14, %c0_15] : memref<8x32xf32, #tpu.memory_space<vmem>>, vector<8x32xf32>
      tpu.vector_store %arg5[%c0_14, %c0_15], %20 {strides = array<i32>} : memref<8x32xf32, #tpu.memory_space<vmem>>, vector<8x32xf32>,
    } else {
    }
    return
  }
  func.func @transform_0(%arg0: i32, %arg1: i32) -> (i32, i32) {
    %c0_i32 = arith.constant 0 : i32
    %c0_i32_0 = arith.constant 0 : i32
    %c0_i32_1 = arith.constant 0 : i32
    return %c0_i32, %c0_i32_0 : i32, i32
  }
  func.func @transform_1(%arg0: i32, %arg1: i32) -> (i32, i32) {
    %c0_i32 = arith.constant 0 : i32
    %c0_i32_0 = arith.constant 0 : i32
    return %c0_i32, %arg1 : i32, i32
  }
  func.func @transform_2(%arg0: i32, %arg1: i32) -> (i32, i32) {
    %c0_i32 = arith.constant 0 : i32
    return %arg1, %arg0 : i32, i32
  }
  func.func @transform_3(%arg0: i32, %arg1: i32) -> (i32, i32) {
    %c0_i32 = arith.constant 0 : i32
    %c0_i32_0 = arith.constant 0 : i32
    return %c0_i32, %arg0 : i32, i32
  }
}

</mosaic_0001>

<llo_original>
// kernel: tpu_custom_call.1
$region0: #{tpu_custom_call.1}
  #allocation0 [shape = 'u32[]', space=smem, size = 0x4, offset = 0x4, fixed_abs, tag = 'smem constant byte address 0x4 - core index']
  #allocation1 [shape = 'u32[144,128]{1,0:T(1,128)}', space=vmem, size = 0x12000, scoped, tag = 'internal scratch']
  #allocation2 [shape = 'f32[8,32]{1,0:T(8,128)}', space=vmem, size = 0x1000, scoped, tag = 'scratch operand']
  %s0 = inlined_call_operand.vmem [shape: f32[8,1], index: 0, kind: input, shape index: {}]
  %s1 = inlined_call_operand.hbm [shape: s32[1,16], index: 1, kind: input, shape index: {}]
  %s2 = inlined_call_operand.vmem [shape: f32[16,32], index: 2, kind: input, shape index: {}]
  %s3 = inlined_call_operand.hbm [shape: f32[8,32], index: 3, kind: output, shape index: {}]
  %s4 = sld [smem:[#allocation0]]
  $region34: #{tpu_custom_call.1} parent=0
    _
  %s6 = ssub.s32 1, %s4
  %s7 = scalar_select 0, %s6, %s4
  $region1: #{tpu_custom_call.1} parent=0
    #allocation3 [shape = 'u8[512]{0}', space=vmem, size = 0x400, scoped, tag = 'input window, operand 1, single buffered']
    #allocation4 [shape = 's32[1]{0}', space=sflag, size = 0x4, scoped, tag = 'scoped memory for tpu_custom_call.1']
    #allocation5 [shape = 's32[1]{0}', space=sflag, size = 0x4, scoped, tag = 'scoped memory for tpu_custom_call.1']
    #allocation6 [shape = 'u8[4096]{0}', space=vmem, size = 0x1000, scoped, tag = 'output window, operand 0, single buffered']
    %8 = vsyncpa [#allocation4], 0
    %9 = vsyncpa [#allocation5], 0
    // Predicated region
    $region2: #{tpu_custom_call.1} parent=1 // pred_check
      _
    $region3: #{tpu_custom_call.1} parent=1 // pred_check_branch
      %11 = sbr.rel (0) target = $region5
    $region4: #{tpu_custom_call.1} parent=1 // pred_region
      _
    $region5: #{tpu_custom_call.1} parent=1 // pred_fallthru
      _
    // Predicated region
    $region6: #{tpu_custom_call.1} parent=1 // pred_check
      _
    $region7: #{tpu_custom_call.1} parent=1 // pred_check_branch
      %13 = sbr.rel (0) target = $region9
    $region8: #{tpu_custom_call.1} parent=1 // pred_region
      %s15 = ssub.s32 16, 16
      %16 = vsyncadd [#allocation4], %s15
      %s18 = sshll.u32 [#allocation3], 4
      %s19 = int_to_ptr.vmem [resolvable:$true] %s18
      %21 = dma.hbm_to_vmem [thread:$0]  %s1, 16, %s19, [#allocation4]
    $region9: #{tpu_custom_call.1} parent=1 // pred_fallthru
      _
    // Predicated region
    $region10: #{tpu_custom_call.1} parent=1 // pred_check
      _
    $region11: #{tpu_custom_call.1} parent=1 // pred_check_branch
      %23 = sbr.rel (0) target = $region13
    $region12: #{tpu_custom_call.1} parent=1 // pred_region
      _
    $region13: #{tpu_custom_call.1} parent=1 // pred_fallthru
      _
    // Predicated region
    $region14: #{tpu_custom_call.1} parent=1 // pred_check
      _
    $region15: #{tpu_custom_call.1} parent=1 // pred_check_branch
      %25 = sbr.rel (0) target = $region17
    $region16: #{tpu_custom_call.1} parent=1 // pred_region
      %26 = dma.done [#allocation4], 16
    $region17: #{tpu_custom_call.1} parent=1 // pred_fallthru
      _
    %p27 = scmp.eq.s32.totalorder 0, 0
    // Predicated region
    $region18: #{tpu_custom_call.1} parent=1 // pred_check
      %p28 = pneg %p27
    $region19: #{tpu_custom_call.1} parent=1 // pred_check_branch
      %30 = sbr.rel (%p28) target = $region21
    $region20: #{tpu_custom_call.1} parent=1 // pred_region
      %vm31 = vcmask 261120
      %32 = vst.msk [vmem:[#allocation2] sm:$0xff] %vm31, 0.0
    $region21: #{tpu_custom_call.1} parent=1 // pred_fallthru
      _
    %v33 = vld [vmem:[%s2] sm:$0xff]
    %v34 = vld [vmem:[%s2 + $0x8] sm:$0xff]
    %v35 = vlaneseq
    %v36 = vshrl.u32 %v35, 7
    %v37 = vld [vmem:[#allocation3] sm:$0x1]
    %v38 = vlaneseq
    %v39 = vshrl.u32 %v38, 7
    %v40 = vsub.s32 0, %v39
    %v41 = vrot.slane %v37, %v40
    %vm42 = vcmp.eq.s32.totalorder %v36, %v41
    %v43 = vsel %vm42, 1, 0
    %v44 = vcvt.s32.f32 %v43
    %v45 = vld [vmem:[#allocation2] sm:$0xff]
    %vm46 = vcmask 130048
    %v48 = vsel %vm46, %v44, 0
    %50 = vmatprep.subr.mxu0 0.0
    %51 = vmatpush1.msra.mxu0 %v33
    %52 = vmatprep.subr.mxu0 0.0
    %53 = vmatpush1.msra.mxu0 %v34
    %54 = vmatprep.subr.mxu0 0.0
    %55 = vmatpush1.msra.mxu0 0.0
    %56 = vmatprep.subr.mxu0 0.0
    %57 = vmatpush1.msra.mxu0 0.0
    %58 = vmatprep.subr.mxu0 0.0
    %59 = vmatpush1.msra.mxu0 0.0
    %60 = vmatprep.subr.mxu0 0.0
    %61 = vmatpush1.msra.mxu0 0.0
    %62 = vmatprep.subr.mxu0 0.0
    %63 = vmatpush1.msra.mxu0 0.0
    %64 = vmatprep.subr.mxu0 0.0
    %65 = vmatpush1.msra.mxu0 0.0
    %66 = vmatprep.subr.mxu0 0.0
    %67 = vmatpush1.msra.mxu0 0.0
    %68 = vmatprep.subr.mxu0 0.0
    %69 = vmatpush1.msra.mxu0 0.0
    %70 = vmatprep.subr.mxu0 0.0
    %71 = vmatpush1.msra.mxu0 0.0
    %72 = vmatprep.subr.mxu0 0.0
    %73 = vmatpush1.msra.mxu0 0.0
    %74 = vmatprep.subr.mxu0 0.0
    %75 = vmatpush1.msra.mxu0 0.0
    %76 = vmatprep.subr.mxu0 0.0
    %77 = vmatpush1.msra.mxu0 0.0
    %78 = vmatprep.subr.mxu0 0.0
    %79 = vmatpush1.msra.mxu0 0.0
    %80 = vmatprep.subr.mxu0 0.0
    %81 = vmatpush1.msra.mxu0 0.0
    %82 = vmatprep.subr.mxu0 0.0
    %83 = vmatpush1.msra.mxu0 0.0
    %84 = vmatprep.subr.mxu0 0.0
    %85 = vmatpush1.msra.mxu0 0.0
    %86 = vmatprep.subr.mxu0 0.0
    %87 = vmatpush1.msra.mxu0 0.0
    %88 = vmatprep.subr.mxu0 0.0
    %89 = vmatpush1.msra.mxu0 0.0
    %90 = vmatprep.subr.mxu0 0.0
    %91 = vmatpush1.msra.mxu0 0.0
    %92 = vmatprep.subr.mxu0 0.0
    %93 = vmatpush1.msra.mxu0 0.0
    %94 = vmatprep.subr.mxu0 0.0
    %95 = vmatpush1.msra.mxu0 0.0
    %96 = vmatprep.subr.mxu0 0.0
    %97 = vmatpush1.msra.mxu0 0.0
    %98 = vmatprep.subr.mxu0 0.0
    %99 = vmatpush1.msra.mxu0 0.0
    %100 = vmatprep.subr.mxu0 0.0
    %101 = vmatpush1.msra.mxu0 0.0
    %102 = vmatprep.subr.mxu0 0.0
    %103 = vmatpush1.msra.mxu0 0.0
    %104 = vmatprep.subr.mxu0 0.0
    %105 = vmatpush1.msra.mxu0 0.0
    %106 = vmatprep.subr.mxu0 0.0
    %107 = vmatpush1.msra.mxu0 0.0
    %108 = vmatprep.subr.mxu0 0.0
    %109 = vmatpush1.msra.mxu0 0.0
    %110 = vmatprep.subr.mxu0 0.0
    %111 = vmatpush1.msra.mxu0 0.0
    %112 = vmatprep.subr.mxu0 0.0
    %113 = vmatpush1.msra.mxu0 0.0
    %114 = vmatprep.mubr.f32.mxu0 0.0
    %115 = vmatmul.mubr.f32.gmra.mrb[0].mxu0 %v48
    %v116 = vpop.f32.mrb[0].mxu0
    %v117 = vadd.f32 0.0, %v116
    %v118 = vpop.f32.mrb[0].mxu0
    %119 = vdwg.mxu0
    %v120 = vadd.f32 %v45, %v117
    %vm121 = vcmask 261120
    %122 = vst.msk [vmem:[#allocation2] sm:$0xff] %vm121, %v120
    // Predicated region
    $region22: #{tpu_custom_call.1} parent=1 // pred_check
      %p123 = pneg %p27
    $region23: #{tpu_custom_call.1} parent=1 // pred_check_branch
      %125 = sbr.rel (%p123) target = $region25
    $region24: #{tpu_custom_call.1} parent=1 // pred_region
      %v126 = vld [vmem:[#allocation2] sm:$0xff]
      %v127 = vld [vmem:[%s0] sm:$0xff]
      %129 = vset.pattern.permute.xlu0 0
      %130 = vperm.xlu0 %129, %v127
      %v131 = vpop.permute.xlu0 %130
      %v133 = vmul.f32 %v126, %v131
      %134 = vst.msk [vmem:[#allocation6] sm:$0xff] %vm121, %v133
    $region25: #{tpu_custom_call.1} parent=1 // pred_fallthru
      _
    // Predicated region
    $region26: #{tpu_custom_call.1} parent=1 // pred_check
      _
    $region27: #{tpu_custom_call.1} parent=1 // pred_check_branch
      %136 = sbr.rel (0) target = $region29
    $region28: #{tpu_custom_call.1} parent=1 // pred_region
      %s138 = ssub.s32 128, 128
      %139 = vsyncadd [#allocation5], %s138
      %s141 = sshll.u32 [#allocation6], 4
      %s142 = int_to_ptr.vmem [resolvable:$true] %s141
      %144 = dma.vmem_to_hbm [thread:$0]  %s142, 128, %s3, [#allocation5]
    $region29: #{tpu_custom_call.1} parent=1 // pred_fallthru
      _
    // Predicated region
    $region30: #{tpu_custom_call.1} parent=1 // pred_check
      _
    $region31: #{tpu_custom_call.1} parent=1 // pred_check_branch
      %146 = sbr.rel (0) target = $region33
    $region32: #{tpu_custom_call.1} parent=1 // pred_region
      %147 = dma.done [#allocation5], 128
    $region33: #{tpu_custom_call.1} parent=1 // pred_fallthru
      _
    %148 = vsyncpa [#allocation4], 1
    %149 = vsyncpa [#allocation5], 1

</llo_original>
